<compile_context>
chip_gen: v7x
topology: tpu7x:2x2x1
jax: 0.10.0
libtpu: 0.0.40
codegen_flags: <defaults>
</compile_context>

<pallas_src>
import jax
import jax.numpy as jnp
from jax.experimental import pallas as pl
from jax.experimental.pallas import tpu as pltpu


def _round_up(x: int, m: int) -> int:
    return ((x + m - 1) // m) * m


def _pick_tile(dim: int, candidates) -> int:
    """Pick the tile size that minimizes padding of `dim` (ties -> largest)."""
    best, best_pad = None, None
    for c in candidates:
        pad = _round_up(max(dim, 1), c) - dim
        if best is None or pad < best_pad or (pad == best_pad and c > best):
            best, best_pad = c, pad
    return best


def _mm_cat_kernel_single_k(x1_ref, x2_ref, o_ref):
    # Whole K fits in one tile: skip the accumulator round-trip entirely.
    v = jnp.dot(
        x1_ref[...], x2_ref[...], preferred_element_type=jnp.float32
    ).astype(o_ref.dtype)
    # torch.cat([v, v], dim=1): same tile into both halves of the fused slab.
    o_ref[:, 0, :] = v
    o_ref[:, 1, :] = v


def _mm_cat_kernel(x1_ref, x2_ref, o_ref, acc_ref):
    k = pl.program_id(2)

    @pl.when(k == 0)
    def _init():
        acc_ref[...] = jnp.zeros_like(acc_ref)

    acc_ref[...] += jnp.dot(
        x1_ref[...], x2_ref[...], preferred_element_type=jnp.float32
    )

    @pl.when(k == pl.num_programs(2) - 1)
    def _store():
        v = acc_ref[...].astype(o_ref.dtype)
        o_ref[:, 0, :] = v
        o_ref[:, 1, :] = v


def mm_cat(x1, x2, *, tm=None, tn=None, tk=None,
           cast_to_bf16=False, input_buffers=2):
    M, K = x1.shape
    K2, N = x2.shape
    assert K == K2, "inner dims must match for mm"
    out_dtype = jnp.result_type(x1.dtype, x2.dtype)

    if cast_to_bf16:
        # Optional v5e lever: halves input DMA bytes; accumulation stays f32.
        x1 = x1.astype(jnp.bfloat16)
        x2 = x2.astype(jnp.bfloat16)

    sublane = {4: 8, 2: 16, 1: 32}.get(jnp.dtype(x1.dtype).itemsize, 8)

    # Tile sizes: big enough to amortize per-step overhead and cut input
    # re-streaming, small enough for comfortable double-buffering everywhere.
    if tm is None:
        tm = _pick_tile(M, (512, 384, 256)) if M > 512 else _round_up(M, sublane)
    if tn is None:
        tn = _pick_tile(N, (512, 384, 256, 128)) if N > 512 else _round_up(N, 128)
    if tk is None:
        tk = _pick_tile(K, (1024, 512, 256, 128)) if K > 1024 else _round_up(K, 128)

    Mp, Kp, Np = _round_up(M, tm), _round_up(K, tk), _round_up(N, tn)

    # Zero-pad only when needed (zeros contribute nothing to the dot); tile
    # selection above minimizes how much padding ever happens.
    x1p = x1 if (Mp == M and Kp == K) else jnp.pad(x1, ((0, Mp - M), (0, Kp - K)))
    x2p = x2 if (Kp == K and Np == N) else jnp.pad(x2, ((0, Kp - K), (0, Np - N)))

    n_k = Kp // tk
    out_itemsize = jnp.dtype(out_dtype).itemsize
    cost = pl.CostEstimate(
        flops=2 * Mp * Kp * Np,
        bytes_accessed=(
            Mp * Kp * jnp.dtype(x1p.dtype).itemsize * (Np // tn)   # x1 re-streamed per N tile
            + Kp * Np * jnp.dtype(x2p.dtype).itemsize * (Mp // tm)  # x2 re-streamed per M tile
            + Mp * 2 * Np * out_itemsize                            # fused cat output
        ),
        transcendentals=0,
    )

    def _in_spec(block_shape, index_map):
        if input_buffers != 2:
            return pl.BlockSpec(block_shape, index_map,
                                pipeline_mode=pl.Buffered(input_buffers))
        return pl.BlockSpec(block_shape, index_map)

    compiler_params = pltpu.CompilerParams(
        dimension_semantics=(
            ("parallel", "parallel") if n_k == 1
            else ("parallel", "parallel", "arbitrary")
        ),
        vmem_limit_bytes=48 * 1024 * 1024,
    )

    out_shape = jax.ShapeDtypeStruct((Mp, 2, Np), out_dtype)

    if n_k == 1:
        o = pl.pallas_call(
            _mm_cat_kernel_single_k,
            out_shape=out_shape,
            grid_spec=pltpu.PrefetchScalarGridSpec(
                num_scalar_prefetch=0,
                grid=(Mp // tm, Np // tn),
                in_specs=[
                    _in_spec((tm, Kp), lambda i, j: (i, 0)),
                    _in_spec((Kp, tn), lambda i, j: (0, j)),
                ],
                out_specs=pl.BlockSpec((tm, 2, tn), lambda i, j: (i, 0, j)),
            ),
            compiler_params=compiler_params,
            cost_estimate=cost,
        )(x1p, x2p)
    else:
        o = pl.pallas_call(
            _mm_cat_kernel,
            out_shape=out_shape,
            grid_spec=pltpu.PrefetchScalarGridSpec(
                num_scalar_prefetch=0,
                grid=(Mp // tm, Np // tn, n_k),
                in_specs=[
                    _in_spec((tm, tk), lambda i, j, k: (i, k)),
                    _in_spec((tk, tn), lambda i, j, k: (k, j)),
                ],
                out_specs=pl.BlockSpec((tm, 2, tn), lambda i, j, k: (i, 0, j)),
                scratch_shapes=[pltpu.VMEM((tm, tn), jnp.float32)],
            ),
            compiler_params=compiler_params,
            cost_estimate=cost,
        )(x1p, x2p)

    # torch.cat([v, v], dim=1) layout: (Mp, 2, Np) -> (M, 2N).
    if Mp == M and Np == N:
        return o.reshape(M, 2 * N)          # free row-major bitcast
    return o[:M, :, :N].reshape(M, 2 * N)   # single slice pass only when padded


if __name__ == "__main__":
    key = jax.random.PRNGKey(0)
    k1, k2, k3, k4 = jax.random.split(key, 4)

    # The original snippet's (4,4) x (2,4) shapes are not mm-compatible; use
    # consistent small (M, K) x (K, N) shapes implied by the forward.
    M, K, N = 4, 8, 16
    x1 = jax.random.normal(k1, (M, K), dtype=jnp.float32)
    x2 = jax.random.normal(k2, (K, N), dtype=jnp.float32)

    out = jax.block_until_ready(mm_cat(x1, x2))
    v_ref = x1 @ x2
    ref = jnp.concatenate([v_ref, v_ref], axis=1)
    assert out.shape == (M, 2 * N)
    assert jnp.allclose(out, ref, atol=1e-5, rtol=1e-5)

    # Exercise the multi-K accumulator path too (still small shapes).
    M2, K2, N2 = 16, 256, 256
    a = jax.random.normal(k3, (M2, K2), dtype=jnp.float32)
    b = jax.random.normal(k4, (K2, N2), dtype=jnp.float32)
    out2 = jax.block_until_ready(mm_cat(a, b, tk=128, tn=128))
    v2 = a @ b
    ref2 = jnp.concatenate([v2, v2], axis=1)
    assert out2.shape == (M2, 2 * N2)
    assert jnp.allclose(out2, ref2, atol=1e-4, rtol=1e-4)

    print("KERNEL_OK")
</pallas_src>

<mosaic_0001>
module attributes {stable_mosaic.version = 11 : i64} {
  func.func @_mm_cat_kernel_single_k(%arg0: i32, %arg1: i32, %arg2: memref<8x128xf32, #tpu.memory_space<vmem>>, %arg3: memref<128x128xf32, #tpu.memory_space<vmem>>, %arg4: memref<8x2x128xf32, #tpu.memory_space<vmem>>) attributes {dimension_semantics = [#tpu.dimension_semantics<parallel>, #tpu.dimension_semantics<parallel>], iteration_bounds = array<i64: 1, 1>, scalar_prefetch = 0 : i64, scratch_operands = 0 : i64, tpu.core_type = #tpu.core_type<tc>, window_params = [{transform_indices = @transform_0, window_bounds = array<i64: 8, 128>}, {transform_indices = @transform_1, window_bounds = array<i64: 128, 128>}, {transform_indices = @transform_2, window_bounds = array<i64: 8, 2, 128>}]} {
    %c0 = arith.constant 0 : index
    %c0_0 = arith.constant 0 : index
    %0 = vector.load %arg2[%c0, %c0_0] : memref<8x128xf32, #tpu.memory_space<vmem>>, vector<8x128xf32>
    %c0_1 = arith.constant 0 : index
    %c0_2 = arith.constant 0 : index
    %1 = vector.load %arg3[%c0_1, %c0_2] : memref<128x128xf32, #tpu.memory_space<vmem>>, vector<128x128xf32>
    %cst = arith.constant dense<0.000000e+00> : vector<8x128xf32>
    %2 = tpu.matmul %0, %1, %cst {dimension_numbers = #tpu.dot_dimension_numbers<[1], [0], [0], [1], [0, 0, 1, 1], [], []>} : vector<8x128xf32>, vector<128x128xf32>, vector<8x128xf32> -> vector<8x128xf32>
    %c0_3 = arith.constant 0 : index
    %c0_4 = arith.constant 0 : index
    %c0_5 = arith.constant 0 : index
    %3 = vector.load %arg4[%c0_3, %c0_4, %c0_5] : memref<8x2x128xf32, #tpu.memory_space<vmem>>, vector<8x1x128xf32>
    %4 = vector.shape_cast %3 : vector<8x1x128xf32> to vector<8x128xf32>
    %5 = vector.shape_cast %2 : vector<8x128xf32> to vector<8x1x128xf32>
    tpu.vector_store %arg4[%c0_3, %c0_4, %c0_5], %5 {strides = array<i32>} : memref<8x2x128xf32, #tpu.memory_space<vmem>>, vector<8x1x128xf32>,
    %c0_6 = arith.constant 0 : index
    %c1 = arith.constant 1 : index
    %c0_7 = arith.constant 0 : index
    %6 = vector.load %arg4[%c0_6, %c1, %c0_7] : memref<8x2x128xf32, #tpu.memory_space<vmem>>, vector<8x1x128xf32>
    %7 = vector.shape_cast %6 : vector<8x1x128xf32> to vector<8x128xf32>
    %8 = vector.shape_cast %2 : vector<8x128xf32> to vector<8x1x128xf32>
    tpu.vector_store %arg4[%c0_6, %c1, %c0_7], %8 {strides = array<i32>} : memref<8x2x128xf32, #tpu.memory_space<vmem>>, vector<8x1x128xf32>,
    return
  }
  func.func @transform_0(%arg0: i32, %arg1: i32) -> (i32, i32) {
    %c0_i32 = arith.constant 0 : i32
    %c0_i32_0 = arith.constant 0 : i32
    return %arg0, %c0_i32 : i32, i32
  }
  func.func @transform_1(%arg0: i32, %arg1: i32) -> (i32, i32) {
    %c0_i32 = arith.constant 0 : i32
    %c0_i32_0 = arith.constant 0 : i32
    return %c0_i32, %arg1 : i32, i32
  }
  func.func @transform_2(%arg0: i32, %arg1: i32) -> (i32, i32, i32) {
    %c0_i32 = arith.constant 0 : i32
    %c0_i32_0 = arith.constant 0 : i32
    return %arg0, %c0_i32, %arg1 : i32, i32, i32
  }
}

</mosaic_0001>

<llo_original>
// kernel: tpu_custom_call.1
$region0: #{tpu_custom_call.1}
  #allocation0 [shape = 'u32[]', space=smem, size = 0x4, offset = 0x4, fixed_abs, tag = 'smem constant byte address 0x4 - core index']
  #allocation1 [shape = 'u32[144,128]{1,0:T(1,128)}', space=vmem, size = 0x12000, scoped, tag = 'internal scratch']
  %s0 = inlined_call_operand.hbm [shape: f32[8,128], index: 0, kind: input, shape index: {}]
  %s1 = inlined_call_operand.hbm [shape: f32[128,128], index: 1, kind: input, shape index: {}]
  %s2 = inlined_call_operand.hbm [shape: f32[8,2,128], index: 2, kind: output, shape index: {}]
  %s3 = sld [smem:[#allocation0]]
  $region26: #{tpu_custom_call.1} parent=0
    _
  %s5 = ssub.s32 1, %s3
  %s6 = scalar_select 0, %s5, %s3
  $region1: #{tpu_custom_call.1} parent=0
    #allocation2 [shape = 'u8[4096]{0}', space=vmem, size = 0x1000, scoped, tag = 'input window, operand 0, single buffered']
    #allocation3 [shape = 's32[1]{0}', space=sflag, size = 0x4, scoped, tag = 'scoped memory for tpu_custom_call.1']
    #allocation4 [shape = 's32[1]{0}', space=sflag, size = 0x4, scoped, tag = 'scoped memory for tpu_custom_call.1']
    #allocation5 [shape = 'u8[65536]{0}', space=vmem, size = 0x10000, scoped, tag = 'input window, operand 1, single buffered']
    #allocation6 [shape = 's32[1]{0}', space=sflag, size = 0x4, scoped, tag = 'scoped memory for tpu_custom_call.1']
    #allocation7 [shape = 'u8[8192]{0}', space=vmem, size = 0x2000, scoped, tag = 'output window, operand 0, single buffered']
    %7 = vsyncpa [#allocation3], 0
    %8 = vsyncpa [#allocation6], 0
    %9 = vsyncpa [#allocation4], 0
    // Predicated region
    $region2: #{tpu_custom_call.1} parent=1 // pred_check
      _
    $region3: #{tpu_custom_call.1} parent=1 // pred_check_branch
      %11 = sbr.rel (0) target = $region5
    $region4: #{tpu_custom_call.1} parent=1 // pred_region
      %s13 = ssub.s32 128, 128
      %14 = vsyncadd [#allocation3], %s13
      %s16 = sshll.u32 [#allocation2], 4
      %s17 = int_to_ptr.vmem [resolvable:$true] %s16
      %19 = dma.hbm_to_vmem [thread:$0]  %s0, 128, %s17, [#allocation3]
    $region5: #{tpu_custom_call.1} parent=1 // pred_fallthru
      _
    // Predicated region
    $region6: #{tpu_custom_call.1} parent=1 // pred_check
      _
    $region7: #{tpu_custom_call.1} parent=1 // pred_check_branch
      %21 = sbr.rel (0) target = $region9
    $region8: #{tpu_custom_call.1} parent=1 // pred_region
      %s23 = ssub.s32 2048, 2048
      %24 = vsyncadd [#allocation6], %s23
      %s25 = sshll.u32 [#allocation5], 4
      %s26 = int_to_ptr.vmem [resolvable:$true] %s25
      %31 = dma.hbm_to_vmem [thread:$0]  %s1, 2048, %s26, [#allocation6], 128, 128, 8
    $region9: #{tpu_custom_call.1} parent=1 // pred_fallthru
      _
    // Predicated region
    $region10: #{tpu_custom_call.1} parent=1 // pred_check
      _
    $region11: #{tpu_custom_call.1} parent=1 // pred_check_branch
      %33 = sbr.rel (0) target = $region13
    $region12: #{tpu_custom_call.1} parent=1 // pred_region
      %34 = dma.done [#allocation3], 128
    $region13: #{tpu_custom_call.1} parent=1 // pred_fallthru
      _
    // Predicated region
    $region14: #{tpu_custom_call.1} parent=1 // pred_check
      _
    $region15: #{tpu_custom_call.1} parent=1 // pred_check_branch
      %36 = sbr.rel (0) target = $region17
    $region16: #{tpu_custom_call.1} parent=1 // pred_region
      %37 = dma.done [#allocation6], 2048
    $region17: #{tpu_custom_call.1} parent=1 // pred_fallthru
      _
    %v38 = vld [vmem:[#allocation2] sm:$0xff]
    %v39 = vld [vmem:[#allocation5] sm:$0xff]
    %v40 = vld [vmem:[#allocation5 + $0x8] sm:$0xff]
    %v41 = vld [vmem:[#allocation5 + $0x10] sm:$0xff]
    %v42 = vld [vmem:[#allocation5 + $0x18] sm:$0xff]
    %v43 = vld [vmem:[#allocation5 + $0x20] sm:$0xff]
    %v44 = vld [vmem:[#allocation5 + $0x28] sm:$0xff]
    %v45 = vld [vmem:[#allocation5 + $0x30] sm:$0xff]
    %v46 = vld [vmem:[#allocation5 + $0x38] sm:$0xff]
    %v47 = vld [vmem:[#allocation5 + $0x40] sm:$0xff]
    %v48 = vld [vmem:[#allocation5 + $0x48] sm:$0xff]
    %v49 = vld [vmem:[#allocation5 + $0x50] sm:$0xff]
    %v50 = vld [vmem:[#allocation5 + $0x58] sm:$0xff]
    %v51 = vld [vmem:[#allocation5 + $0x60] sm:$0xff]
    %v52 = vld [vmem:[#allocation5 + $0x68] sm:$0xff]
    %v53 = vld [vmem:[#allocation5 + $0x70] sm:$0xff]
    %v54 = vld [vmem:[#allocation5 + $0x78] sm:$0xff]
    %55 = vmatprep.subr.mxu0 0.0
    %56 = vmatpush1.msra.mxu0 %v39
    %57 = vmatprep.subr.mxu0 0.0
    %58 = vmatpush1.msra.mxu0 %v40
    %59 = vmatprep.subr.mxu0 0.0
    %60 = vmatpush1.msra.mxu0 %v41
    %61 = vmatprep.subr.mxu0 0.0
    %62 = vmatpush1.msra.mxu0 %v42
    %63 = vmatprep.subr.mxu0 0.0
    %64 = vmatpush1.msra.mxu0 %v43
    %65 = vmatprep.subr.mxu0 0.0
    %66 = vmatpush1.msra.mxu0 %v44
    %67 = vmatprep.subr.mxu0 0.0
    %68 = vmatpush1.msra.mxu0 %v45
    %69 = vmatprep.subr.mxu0 0.0
    %70 = vmatpush1.msra.mxu0 %v46
    %71 = vmatprep.subr.mxu0 0.0
    %72 = vmatpush1.msra.mxu0 %v47
    %73 = vmatprep.subr.mxu0 0.0
    %74 = vmatpush1.msra.mxu0 %v48
    %75 = vmatprep.subr.mxu0 0.0
    %76 = vmatpush1.msra.mxu0 %v49
    %77 = vmatprep.subr.mxu0 0.0
    %78 = vmatpush1.msra.mxu0 %v50
    %79 = vmatprep.subr.mxu0 0.0
    %80 = vmatpush1.msra.mxu0 %v51
    %81 = vmatprep.subr.mxu0 0.0
    %82 = vmatpush1.msra.mxu0 %v52
    %83 = vmatprep.subr.mxu0 0.0
    %84 = vmatpush1.msra.mxu0 %v53
    %85 = vmatprep.subr.mxu0 0.0
    %86 = vmatpush1.msra.mxu0 %v54
    %87 = vmatprep.subr.mxu0 0.0
    %88 = vmatpush1.msra.mxu0 0.0
    %89 = vmatprep.subr.mxu0 0.0
    %90 = vmatpush1.msra.mxu0 0.0
    %91 = vmatprep.subr.mxu0 0.0
    %92 = vmatpush1.msra.mxu0 0.0
    %93 = vmatprep.subr.mxu0 0.0
    %94 = vmatpush1.msra.mxu0 0.0
    %95 = vmatprep.subr.mxu0 0.0
    %96 = vmatpush1.msra.mxu0 0.0
    %97 = vmatprep.subr.mxu0 0.0
    %98 = vmatpush1.msra.mxu0 0.0
    %99 = vmatprep.subr.mxu0 0.0
    %100 = vmatpush1.msra.mxu0 0.0
    %101 = vmatprep.subr.mxu0 0.0
    %102 = vmatpush1.msra.mxu0 0.0
    %103 = vmatprep.subr.mxu0 0.0
    %104 = vmatpush1.msra.mxu0 0.0
    %105 = vmatprep.subr.mxu0 0.0
    %106 = vmatpush1.msra.mxu0 0.0
    %107 = vmatprep.subr.mxu0 0.0
    %108 = vmatpush1.msra.mxu0 0.0
    %109 = vmatprep.subr.mxu0 0.0
    %110 = vmatpush1.msra.mxu0 0.0
    %111 = vmatprep.subr.mxu0 0.0
    %112 = vmatpush1.msra.mxu0 0.0
    %113 = vmatprep.subr.mxu0 0.0
    %114 = vmatpush1.msra.mxu0 0.0
    %115 = vmatprep.subr.mxu0 0.0
    %116 = vmatpush1.msra.mxu0 0.0
    %117 = vmatprep.subr.mxu0 0.0
    %118 = vmatpush1.msra.mxu0 0.0
    %119 = vmatprep.mubr.f32.mxu0 0.0
    %120 = vmatmul.mubr.f32.gmra.mrb[0].mxu0 %v38
    %v121 = vpop.f32.mrb[0].mxu0
    %v122 = vadd.f32 0.0, %v121
    %v123 = vpop.f32.mrb[0].mxu0
    %124 = vdwg.mxu0
    %v126 = vcombine.high %v122, %v122
    %v128 = vunpack.c.l.s4 1966171168
    %v129 = vunpack.c.0.s8 %v128
    %v130 = vlaneseq
    %v131 = vshrl.u32 %v130, 7
    %v132 = vsub.s32 %v129, %v131
    %v133 = vrot.slane %v122, %v132
    %v135 = vunpack.c.l.s4 1966171168
    %v136 = vunpack.c.0.s8 %v135
    %v137 = vlaneseq
    %v138 = vshrl.u32 %v137, 7
    %v139 = vsub.s32 %v136, %v138
    %v140 = vrot.slane %v126, %v139
    %v141 = vcombine.high %v133, %v133
    %v142 = vcombine.high %v140, %v140
    %v144 = vunpack.c.l.s4 1966171168
    %v145 = vunpack.c.0.s8 %v144
    %v146 = vlaneseq
    %v147 = vshrl.u32 %v146, 7
    %v148 = vsub.s32 %v145, %v147
    %v149 = vrot.slane %v133, %v148
    %v151 = vunpack.c.l.s4 1966171168
    %v152 = vunpack.c.0.s8 %v151
    %v153 = vlaneseq
    %v154 = vshrl.u32 %v153, 7
    %v155 = vsub.s32 %v152, %v154
    %v156 = vrot.slane %v140, %v155
    %v158 = vunpack.c.l.s4 1966171168
    %v159 = vunpack.c.0.s8 %v158
    %v160 = vlaneseq
    %v161 = vshrl.u32 %v160, 7
    %v162 = vsub.s32 %v159, %v161
    %v163 = vrot.slane %v141, %v162
    %v165 = vunpack.c.l.s4 1966171168
    %v166 = vunpack.c.0.s8 %v165
    %v167 = vlaneseq
    %v168 = vshrl.u32 %v167, 7
    %v169 = vsub.s32 %v166, %v168
    %v170 = vrot.slane %v142, %v169
    %v171 = vcombine.high %v149, %v149
    %v172 = vcombine.high %v156, %v156
    %v173 = vcombine.high %v163, %v163
    %v174 = vcombine.high %v170, %v170
    %183 = vst [vmem:[#allocation7] sm:$0x1] %v149
    %184 = vst [vmem:[#allocation7 + $0x2] sm:$0x1] %v163
    %185 = vst [vmem:[#allocation7 + $0x4] sm:$0x1] %v171
    %186 = vst [vmem:[#allocation7 + $0x6] sm:$0x1] %v173
    %187 = vst [vmem:[#allocation7 + $0x8] sm:$0x1] %v156
    %188 = vst [vmem:[#allocation7 + $0xa] sm:$0x1] %v170
    %189 = vst [vmem:[#allocation7 + $0xc] sm:$0x1] %v172
    %190 = vst [vmem:[#allocation7 + $0xe] sm:$0x1] %v174
    %191 = vst [vmem:[#allocation7 + $0x1] sm:$0x1] %v149
    %192 = vst [vmem:[#allocation7 + $0x3] sm:$0x1] %v163
    %193 = vst [vmem:[#allocation7 + $0x5] sm:$0x1] %v171
    %194 = vst [vmem:[#allocation7 + $0x7] sm:$0x1] %v173
    %195 = vst [vmem:[#allocation7 + $0x9] sm:$0x1] %v156
    %196 = vst [vmem:[#allocation7 + $0xb] sm:$0x1] %v170
    %197 = vst [vmem:[#allocation7 + $0xd] sm:$0x1] %v172
    %198 = vst [vmem:[#allocation7 + $0xf] sm:$0x1] %v174
    // Predicated region
    $region18: #{tpu_custom_call.1} parent=1 // pred_check
      _
    $region19: #{tpu_custom_call.1} parent=1 // pred_check_branch
      %200 = sbr.rel (0) target = $region21
    $region20: #{tpu_custom_call.1} parent=1 // pred_region
      %s202 = ssub.s32 256, 256
      %203 = vsyncadd [#allocation4], %s202
      %s204 = sshll.u32 [#allocation7], 4
      %s205 = int_to_ptr.vmem [resolvable:$true] %s204
      %210 = dma.vmem_to_hbm [thread:$0]  %s205, 256, %s2, [#allocation4], 32, 32, 2
    $region21: #{tpu_custom_call.1} parent=1 // pred_fallthru
      _
    // Predicated region
    $region22: #{tpu_custom_call.1} parent=1 // pred_check
      _
    $region23: #{tpu_custom_call.1} parent=1 // pred_check_branch
      %212 = sbr.rel (0) target = $region25
    $region24: #{tpu_custom_call.1} parent=1 // pred_region
      %213 = dma.done [#allocation4], 256
    $region25: #{tpu_custom_call.1} parent=1 // pred_fallthru
      _
    %214 = vsyncpa [#allocation3], 1
    %215 = vsyncpa [#allocation6], 1
    %216 = vsyncpa [#allocation4], 1

</llo_original>
